<compile_context>
chip_gen: v7x
topology: tpu7x:2x2x1
jax: 0.10.0
libtpu: 0.0.40
codegen_flags: <defaults>
</compile_context>

<pallas_src>
import functools

import jax
import jax.numpy as jnp
from jax import lax
from jax.experimental import pallas as pl
from jax.experimental.pallas import tpu as pltpu


def _round_down(v, m):
    return (v // m) * m


def _accum_tile(x_ref, valid, rows):
    """Sum / sum-of-squares over the first `valid` columns of the current tile.

    Accumulates per 128-lane column group with plain VPU adds carried in vregs
    (no per-tile cross-lane XLU reduction). `valid` is a Python constant.
    """
    zeros = jnp.zeros((rows, 128), jnp.float32)
    n_full = valid // 128
    rem = valid % 128
    s, q = zeros, zeros
    if n_full > 0:
        def body(k, carry):
            cs, cq = carry
            start = pl.multiple_of(k * 128, 128)
            seg = x_ref[:, pl.ds(start, 128)].astype(jnp.float32)
            return cs + seg, cq + seg * seg
        s, q = lax.fori_loop(0, n_full, body, (s, q),
                             unroll=max(1, min(8, n_full)))
    if rem > 0:
        # Partial boundary segment (only ever traced for the last HW tile):
        # load the full 128-lane group (still inside the VMEM tile) and
        # select-away out-of-range columns BEFORE any arithmetic so stale
        # garbage (even NaNs) cannot leak into the sums.
        seg = x_ref[:, pl.ds(n_full * 128, 128)].astype(jnp.float32)
        lane = lax.broadcasted_iota(jnp.int32, (rows, 128), 1)
        seg = jnp.where(lane < rem, seg, 0.0)
        s = s + seg
        q = q + seg * seg
    return s, q


def _color_stats_kernel(x_ref, sum_ref, sq_ref, *, rows, lane_tile,
                        tiles_per_split, num_tiles, valid_last):
    """grid = (core_split, hw_tile).  Accumulates per-row sum / sumsq partials
    of shape (rows, 128) directly into the (resident) output blocks."""
    s_id = pl.program_id(0)          # "parallel"  : per-TensorCore split
    t_id = pl.program_id(1)          # "arbitrary" : HW reduction axis (last)
    abs_t = s_id * tiles_per_split + t_id

    @pl.when(t_id == 0)
    def _init():                     # each split owns its own output block
        sum_ref[...] = jnp.zeros_like(sum_ref)
        sq_ref[...] = jnp.zeros_like(sq_ref)

    if valid_last == lane_tile:
        # lane_tile divides the padded-to-128 column count: every tile is full.
        ps, pq = _accum_tile(x_ref, lane_tile, rows)
        sum_ref[...] += ps
        sq_ref[...] += pq
    else:
        @pl.when(abs_t != num_tiles - 1)
        def _full_tiles():           # hot path: completely mask-free
            ps, pq = _accum_tile(x_ref, lane_tile, rows)
            sum_ref[...] += ps
            sq_ref[...] += pq

        @pl.when(abs_t == num_tiles - 1)
        def _ragged_tile():          # only the very last tile pays mask cost
            ps, pq = _accum_tile(x_ref, valid_last, rows)
            sum_ref[...] += ps
            sq_ref[...] += pq


def color_loss_two(inp, tar=None, *, max_lane_tile=65536):
    """ColorLosstwo.forward.  `tar` is accepted for signature parity only (its
    normalization in the reference is dead code w.r.t. the returned loss)."""
    del tar
    n, c, h, w = inp.shape
    if c < 3:
        raise ValueError("ColorLosstwo expects at least 3 channels (RGB).")
    hw = h * w
    itemsize = jnp.dtype(inp.dtype).itemsize

    # ---- lane-dense view (free, contiguous reshapes; native dtype) ---------
    fold = 8 if (hw % 8 == 0 and hw // 8 >= 128) else 1
    rows = n * c * fold
    cols = hw // fold
    x = inp.reshape(rows, cols)

    # Tiny-image case only: pad the lane dim to one full 128-lane group with
    # zeros (sum/sumsq-neutral).  A few KiB, unlike a full-slab pad.
    if cols < 128:
        x = jnp.pad(x, ((0, 0), (0, 128 - cols)))
        cols_b = 128
    else:
        cols_b = cols

    # ---- chip-aware tile sizing --------------------------------------------
    try:
        vmem_cap = int(getattr(pltpu.get_tpu_info(), "vmem_capacity_bytes",
                               64 * 1024 * 1024))
    except Exception:  # pragma: no cover - conservative fallback (v7x per-TC)
        vmem_cap = 64 * 1024 * 1024
    block_budget = min(16 * 1024 * 1024, vmem_cap // 8)   # per input block
    budget_lanes = max(128, _round_down(block_budget // (rows * itemsize), 128))
    lane_cap = _round_down(cols_b, 128)                    # keep block <= array
    lane_tile = int(min(lane_cap, budget_lanes,
                        max(128, _round_down(max_lane_tile, 128))))
    num_tiles = -(-cols_b // lane_tile)
    valid_last = cols_b - (num_tiles - 1) * lane_tile      # Python constant

    # ---- optional 2-TensorCore split (helps v7x; harmless elsewhere) -------
    n_split = 2 if (num_tiles % 2 == 0 and num_tiles >= 2 and rows % 8 == 0) else 1
    tiles_per_split = num_tiles // n_split

    in_block_bytes = rows * lane_tile * itemsize
    vmem_limit = int(min(vmem_cap // 2, 2 * in_block_bytes + (4 << 20)))

    kernel = functools.partial(
        _color_stats_kernel, rows=rows, lane_tile=lane_tile,
        tiles_per_split=tiles_per_split, num_tiles=num_tiles,
        valid_last=valid_last)

    out_sd = jax.ShapeDtypeStruct((n_split * rows, 128), jnp.float32)
    out_spec = pl.BlockSpec((rows, 128), lambda s, t: (s, 0))

    psum, psq = pl.pallas_call(
        kernel,
        out_shape=(out_sd, out_sd),
        grid_spec=pltpu.PrefetchScalarGridSpec(
            num_scalar_prefetch=0,
            grid=(n_split, tiles_per_split),           # reduction axis last
            in_specs=[pl.BlockSpec(
                (rows, lane_tile),
                lambda s, t: (0, s * tiles_per_split + t))],
            out_specs=(out_spec, out_spec),
        ),
        compiler_params=pltpu.CompilerParams(
            dimension_semantics=("parallel", "arbitrary"),
            vmem_limit_bytes=vmem_limit),
    )(x)

    # ---- tiny O(N*C) epilogue in JAX ----------------------------------------
    s = psum.reshape(n_split, n, c, fold, 128).sum(axis=(0, 3, 4))   # (n, c)
    ss = psq.reshape(n_split, n, c, fold, 128).sum(axis=(0, 3, 4))
    hw_f = float(hw)
    mean = s / hw_f
    # torch.std default is unbiased -> divisor (HW - 1); clamp guards the
    # one-pass cancellation.
    var = jnp.maximum((ss - hw_f * mean * mean) / float(max(hw - 1, 1)), 0.0)
    inv = 1.0 / (jnp.sqrt(var) + 1e-8)
    # Single-pass identity: mean((x - mean) / (std + eps)) == (mean(x) - mean) * inv
    mu = (s / hw_f - mean) * inv                                     # (n, c)
    r, g, b = mu[:, 0], mu[:, 1], mu[:, 2]
    loss = jnp.mean((r - g) ** 2 + (r - b) ** 2 + (g - b) ** 2) + 1e-8
    return loss


def _reference_loss(inp):
    """Pure-JAX reference of the same forward (for the self-check below)."""
    x = inp.astype(jnp.float32)
    mean = x.mean(axis=(2, 3), keepdims=True)
    std = x.std(axis=(2, 3), keepdims=True, ddof=1)   # torch default: unbiased
    xn = (x - mean) / (std + 1e-8)
    r = xn[:, 0].mean(axis=(1, 2))
    g = xn[:, 1].mean(axis=(1, 2))
    b = xn[:, 2].mean(axis=(1, 2))
    return ((r - g) ** 2 + (r - b) ** 2 + (g - b) ** 2).mean() + 1e-8


if __name__ == "__main__":
    key = jax.random.PRNGKey(0)
    loss_fn = jax.jit(color_loss_two)
    # Shape 1: minimal case (single full tile, no fold, no split).
    # Shape 2: exercises sublane folding, the ragged-last-tile mask and the
    #          2-way core split, while staying small.
    for shape in [(2, 3, 16, 16), (2, 3, 64, 72)]:
        key, k_inp, k_tar = jax.random.split(key, 3)
        inp = jax.random.uniform(k_inp, shape, dtype=jnp.float32)
        tar = jax.random.uniform(k_tar, shape, dtype=jnp.float32)
        loss = loss_fn(inp, tar)
        loss = jax.block_until_ready(loss)
        ref = _reference_loss(inp)
        assert loss.shape == () and bool(jnp.isfinite(loss)), (shape, loss)
        assert abs(float(loss) - float(ref)) < 1e-9, (shape, float(loss), float(ref))
    print("KERNEL_OK")
</pallas_src>

<mosaic_0001>
module attributes {stable_mosaic.version = 11 : i64} {
  func.func @_color_stats_kernel(%arg0: i32, %arg1: i32, %arg2: memref<6x256xf32, #tpu.memory_space<vmem>>, %arg3: memref<6x128xf32, #tpu.memory_space<vmem>>, %arg4: memref<6x128xf32, #tpu.memory_space<vmem>>) attributes {dimension_semantics = [#tpu.dimension_semantics<parallel>, #tpu.dimension_semantics<arbitrary>], iteration_bounds = array<i64: 1, 1>, scalar_prefetch = 0 : i64, scratch_operands = 0 : i64, tpu.core_type = #tpu.core_type<tc>, window_params = [{transform_indices = @transform_0, window_bounds = array<i64: 6, 256>}, {transform_indices = @transform_1, window_bounds = array<i64: 6, 128>}, {transform_indices = @transform_2, window_bounds = array<i64: 6, 128>}]} {
    %c0_i32 = arith.constant 0 : i32
    %0 = arith.cmpi eq, %arg1, %c0_i32 : i32
    %1 = arith.extui %0 : i1 to i32
    %c0_i32_0 = arith.constant 0 : i32
    %2 = arith.cmpi ne, %1, %c0_i32_0 : i32
    scf.if %2 {
      %cst_12 = arith.constant 0.000000e+00 : f32
      %24 = vector.broadcast %cst_12 : f32 to vector<6x128xf32>
      %c0_13 = arith.constant 0 : index
      %c0_14 = arith.constant 0 : index
      %25 = vector.load %arg3[%c0_13, %c0_14] : memref<6x128xf32, #tpu.memory_space<vmem>>, vector<6x128xf32>
      tpu.vector_store %arg3[%c0_13, %c0_14], %24 {strides = array<i32>} : memref<6x128xf32, #tpu.memory_space<vmem>>, vector<6x128xf32>,
      %cst_15 = arith.constant 0.000000e+00 : f32
      %26 = vector.broadcast %cst_15 : f32 to vector<6x128xf32>
      %c0_16 = arith.constant 0 : index
      %c0_17 = arith.constant 0 : index
      %27 = vector.load %arg4[%c0_16, %c0_17] : memref<6x128xf32, #tpu.memory_space<vmem>>, vector<6x128xf32>
      tpu.vector_store %arg4[%c0_16, %c0_17], %26 {strides = array<i32>} : memref<6x128xf32, #tpu.memory_space<vmem>>, vector<6x128xf32>,
    } else {
    }
    %cst = arith.constant 0.000000e+00 : f32
    %3 = vector.broadcast %cst : f32 to vector<6x128xf32>
    %c0_i32_1 = arith.constant 0 : i32
    %c128_i32 = arith.constant 128 : i32
    %4 = arith.muli %c0_i32_1, %c128_i32 : i32
    %5 = tpu.assume_multiple %4, 128 : i32
    %c0 = arith.constant 0 : index
    %6 = arith.index_cast %5 : i32 to index
    %7 = vector.load %arg2[%c0, %6] : memref<6x256xf32, #tpu.memory_space<vmem>>, vector<6x128xf32>
    %8 = arith.addf %3, %7 : vector<6x128xf32>
    %9 = arith.mulf %7, %7 : vector<6x128xf32>
    %10 = arith.addf %3, %9 : vector<6x128xf32>
    %c1_i32 = arith.constant 1 : i32
    %c128_i32_2 = arith.constant 128 : i32
    %11 = arith.muli %c1_i32, %c128_i32_2 : i32
    %12 = tpu.assume_multiple %11, 128 : i32
    %c0_3 = arith.constant 0 : index
    %13 = arith.index_cast %12 : i32 to index
    %14 = vector.load %arg2[%c0_3, %13] : memref<6x256xf32, #tpu.memory_space<vmem>>, vector<6x128xf32>
    %15 = arith.addf %8, %14 : vector<6x128xf32>
    %16 = arith.mulf %14, %14 : vector<6x128xf32>
    %17 = arith.addf %10, %16 : vector<6x128xf32>
    %c2_i32 = arith.constant 2 : i32
    %c0_4 = arith.constant 0 : index
    %c0_5 = arith.constant 0 : index
    %18 = vector.load %arg3[%c0_4, %c0_5] : memref<6x128xf32, #tpu.memory_space<vmem>>, vector<6x128xf32>
    %19 = arith.addf %18, %15 : vector<6x128xf32>
    %c0_6 = arith.constant 0 : index
    %c0_7 = arith.constant 0 : index
    %20 = vector.load %arg3[%c0_6, %c0_7] : memref<6x128xf32, #tpu.memory_space<vmem>>, vector<6x128xf32>
    tpu.vector_store %arg3[%c0_6, %c0_7], %19 {strides = array<i32>} : memref<6x128xf32, #tpu.memory_space<vmem>>, vector<6x128xf32>,
    %c0_8 = arith.constant 0 : index
    %c0_9 = arith.constant 0 : index
    %21 = vector.load %arg4[%c0_8, %c0_9] : memref<6x128xf32, #tpu.memory_space<vmem>>, vector<6x128xf32>
    %22 = arith.addf %21, %17 : vector<6x128xf32>
    %c0_10 = arith.constant 0 : index
    %c0_11 = arith.constant 0 : index
    %23 = vector.load %arg4[%c0_10, %c0_11] : memref<6x128xf32, #tpu.memory_space<vmem>>, vector<6x128xf32>
    tpu.vector_store %arg4[%c0_10, %c0_11], %22 {strides = array<i32>} : memref<6x128xf32, #tpu.memory_space<vmem>>, vector<6x128xf32>,
    return
  }
  func.func @transform_0(%arg0: i32, %arg1: i32) -> (i32, i32) {
    %c1_i32 = arith.constant 1 : i32
    %0 = arith.muli %arg0, %c1_i32 : i32
    %1 = arith.addi %0, %arg1 : i32
    %c0_i32 = arith.constant 0 : i32
    %c0_i32_0 = arith.constant 0 : i32
    return %c0_i32, %1 : i32, i32
  }
  func.func @transform_1(%arg0: i32, %arg1: i32) -> (i32, i32) {
    %c0_i32 = arith.constant 0 : i32
    %c0_i32_0 = arith.constant 0 : i32
    return %arg0, %c0_i32 : i32, i32
  }
  func.func @transform_2(%arg0: i32, %arg1: i32) -> (i32, i32) {
    %c0_i32 = arith.constant 0 : i32
    %c0_i32_0 = arith.constant 0 : i32
    return %arg0, %c0_i32 : i32, i32
  }
}

</mosaic_0001>

<llo_original>
// kernel: color_loss_two.1
$region0: #{color_loss_two.1}
  #allocation0 [shape = 'u32[]', space=smem, size = 0x4, offset = 0x4, fixed_abs, tag = 'smem constant byte address 0x4 - core index']
  #allocation1 [shape = 'u32[144,128]{1,0:T(1,128)}', space=vmem, size = 0x12000, scoped, tag = 'internal scratch']
  %s0 = inlined_call_operand.vmem [shape: f32[6,256], index: 0, kind: input, shape index: {}]
  %s1 = inlined_call_operand.vmem [shape: f32[6,128], index: 1, kind: output, shape index: {0}]
  %s2 = inlined_call_operand.vmem [shape: f32[6,128], index: 2, kind: output, shape index: {1}]
  %3 = xla_tuple %s1, %s2
  %s4 = sld [smem:[#allocation0]]
  $region26: #{color_loss_two.1} parent=0
    _
  %s6 = ssub.s32 1, %s4
  %s7 = scalar_select 0, %s6, %s4
  // Predicated region
  $region2: #{color_loss_two.1} parent=0 // pred_check
    _
  $region3: #{color_loss_two.1} parent=0 // pred_check_branch
    %9 = sbr.rel (0) target = $region5
  $region4: #{color_loss_two.1} parent=0 // pred_region
    %s10 = sadd.s32 0, 0
    %s11 = smul.u32 2, %s10
    %p12 = scmp.lt.s32.totalorder %s11, 1
    %s13 = scalar_select %p12, %s11, 1
    %s14 = smul.addr %s13, 8
    %s15 = scalar_lea.vmem %s0, %s14
    %s16 = sadd.s32 0, 0
    %s17 = smul.u32 2, %s16
  $region5: #{color_loss_two.1} parent=0 // pred_fallthru
    _
  %s18 = sadd.s32 0, 0
  %s19 = smul.u32 2, %s18
  %p20 = scmp.lt.s32.totalorder %s19, 1
  %s21 = scalar_select %p20, %s19, 1
  %s22 = smul.addr %s21, 8
  %s23 = scalar_lea.vmem %s0, %s22
  %s24 = sadd.s32 0, 0
  %s25 = smul.u32 2, %s24
  %p26 = scmp.lt.s32.totalorder %s25, 1
  %s27 = scalar_select %p26, %s25, 1
  %s28 = smul.addr %s27, 8
  %s29 = scalar_lea.vmem %s0, %s28
  %s30 = sadd.s32 0, 0
  %s31 = smul.u32 2, %s30
  %p32 = scmp.eq.s32.totalorder 0, 0
  // Predicated region
  $region6: #{color_loss_two.1} parent=0 // pred_check
    %p33 = pneg %p32
  $region7: #{color_loss_two.1} parent=0 // pred_check_branch
    %35 = sbr.rel (%p33) target = $region9
  $region8: #{color_loss_two.1} parent=0 // pred_region
    %36 = vst [vmem:[%s1] sm:$0x3f] 0.0
    %37 = vst [vmem:[%s2] sm:$0x3f] 0.0
  $region9: #{color_loss_two.1} parent=0 // pred_fallthru
    _
  %v38 = vld [vmem:[%s29] sm:$0x3f]
  %v39 = vadd.f32 %v38, 0.0
  %v40 = vmul.f32 %v38, %v38
  %v41 = vadd.f32 %v40, 0.0
  %s42 = scalar_lea.vmem %s29, 8
  %v43 = vld [vmem:[%s42] sm:$0x3f]
  %v44 = vadd.f32 %v39, %v43
  %v45 = vmul.f32 %v43, %v43
  %v46 = vadd.f32 %v41, %v45
  %v47 = vld [vmem:[%s1] sm:$0x3f]
  %v48 = vadd.f32 %v47, %v44
  %49 = vst [vmem:[%s1] sm:$0x3f] %v48
  %v50 = vld [vmem:[%s2] sm:$0x3f]
  %v51 = vadd.f32 %v50, %v46
  %52 = vst [vmem:[%s2] sm:$0x3f] %v51
  // Predicated region
  $region10: #{color_loss_two.1} parent=0 // pred_check
    _
  $region11: #{color_loss_two.1} parent=0 // pred_check_branch
    %54 = sbr.rel (0) target = $region13
  $region12: #{color_loss_two.1} parent=0 // pred_region
    _
  $region13: #{color_loss_two.1} parent=0 // pred_fallthru
    _
  // Predicated region
  $region14: #{color_loss_two.1} parent=0 // pred_check
    _
  $region15: #{color_loss_two.1} parent=0 // pred_check_branch
    %56 = sbr.rel (0) target = $region17
  $region16: #{color_loss_two.1} parent=0 // pred_region
    _
  $region17: #{color_loss_two.1} parent=0 // pred_fallthru
    _
  // Predicated region
  $region18: #{color_loss_two.1} parent=0 // pred_check
    _
  $region19: #{color_loss_two.1} parent=0 // pred_check_branch
    %58 = sbr.rel (0) target = $region21
  $region20: #{color_loss_two.1} parent=0 // pred_region
    _
  $region21: #{color_loss_two.1} parent=0 // pred_fallthru
    _
  // Predicated region
  $region22: #{color_loss_two.1} parent=0 // pred_check
    _
  $region23: #{color_loss_two.1} parent=0 // pred_check_branch
    %60 = sbr.rel (0) target = $region25
  $region24: #{color_loss_two.1} parent=0 // pred_region
    _
  $region25: #{color_loss_two.1} parent=0 // pred_fallthru
    _

</llo_original>
